<compile_context>
chip_gen: v7x
topology: tpu7x:2x2x1
jax: 0.10.0
libtpu: 0.0.40
codegen_flags: <defaults>
</compile_context>

<pallas_src>
import jax
import jax.numpy as jnp
from jax import lax
from jax.experimental import pallas as pl
from jax.experimental.pallas import tpu as pltpu


def _round_up(x, m):
    return ((x + m - 1) // m) * m


def _tpu_generation_info():
    """Best-effort (num_tensorcores, vmem_bytes_per_core) for the default device."""
    num_tc = None
    vmem_cap = None
    try:
        info = pltpu.get_tpu_info()
        v = getattr(info, "vmem_capacity_bytes", None)
        if v:
            vmem_cap = int(v)
        for name in ("num_cores", "num_tensorcores", "tensorcore_count", "cores_per_chip"):
            c = getattr(info, name, None)
            if c:
                num_tc = int(c)
                break
    except Exception:
        pass
    kind = ""
    try:
        kind = jax.devices()[0].device_kind.lower()
    except Exception:
        pass
    is_v7 = ("v7" in kind) or ("7x" in kind)
    two_tc = is_v7 or ("v4" in kind) or ("v5p" in kind)
    if num_tc is None:
        num_tc = 2 if two_tc else 1
    if vmem_cap is None:
        # 128 MiB per TC on v5e/v6e, 64 MiB per TC on v7x.
        vmem_cap = (64 if is_v7 else 128) * 1024 * 1024
    return num_tc, vmem_cap


def _plan_blocks(batch_p, nxp, a_bytes, out_itemsize, requested_t_chunk, nsteps,
                 num_tc, vmem_cap):
    """Pick (batch_block, t_chunk) that respects the per-generation VMEM budget."""
    bb = batch_p
    # Only shard the batch across TensorCores when there are actually >= 2 of them
    # (v7x / v4 / v5p); on single-TC v5e/v6e a split would just serialize the chain.
    if num_tc >= 2 and batch_p % (8 * num_tc) == 0 and batch_p // num_tc >= 8:
        bb = batch_p // num_tc

    budget = vmem_cap // 2                                   # headroom for the compiler
    resident = 2 * a_bytes + 3 * bb * nxp * 4                # A (2 slots) + x0 (2) + state
    per_step_io = 2 * bb * nxp * (4 + out_itemsize)          # double-buffered in + out row
    if budget > resident:
        max_tc = max(1, (budget - resident) // per_step_io)
    else:
        max_tc = 1
    t_chunk = int(max(1, min(requested_t_chunk, max_tc, nsteps + 1)))
    return bb, t_chunk


def _make_rollout_kernel(t_chunk, n_sub, unroll):
    """One grid step = t_chunk rows of the rollout (row 0 of the whole output is x0)."""

    def kernel(uproj_ref, a_ref, x0_ref, xout_ref, x_state):
        # uproj_ref : (t_chunk, bb, nxp) f32   time-shifted u@B + bias (row r drives row r)
        # a_ref     : (nxp, nxp)               state-transition weights (resident)
        # x0_ref    : (bb, nxp) f32            initial state for this batch shard
        # xout_ref  : (t_chunk, bb, nxp)       output rows (row 0 overall = x0)
        # x_state   : (bb, nxp) f32 VMEM       recurrent state, persists across time chunks
        t = pl.program_id(1)

        @pl.when(t == 0)
        def _():
            x_state[...] = x0_ref[...].astype(jnp.float32)

        a = a_ref[...]
        bb = x_state.shape[0]
        sub = bb // n_sub
        first_chunk = t == 0

        def step(s, carry):
            row0 = first_chunk & (s == 0)          # global output row 0 holds x0 itself
            u_s = uproj_ref[s]                     # (bb, nxp) f32
            # Independent per-sub-block chains: one chain's MXU push overlaps the
            # other's VPU add / EUP tanh (the recurrence is latency-bound).
            ys = [jnp.dot(carry[i].astype(a.dtype), a,
                          preferred_element_type=jnp.float32)
                  for i in range(n_sub)]
            new = []
            for i in range(n_sub):
                ui = u_s if n_sub == 1 else u_s[i * sub:(i + 1) * sub]
                xi = jnp.tanh(ys[i] + ui)
                xi = jnp.where(row0, carry[i], xi)
                new.append(xi)
            if n_sub == 1:
                xout_ref[s] = new[0].astype(xout_ref.dtype)
            else:
                for i in range(n_sub):
                    xout_ref[s, pl.ds(i * sub, sub)] = new[i].astype(xout_ref.dtype)
            return tuple(new)

        init = tuple(x_state[pl.ds(i * sub, sub)] for i in range(n_sub))
        final = lax.fori_loop(0, t_chunk, step, init, unroll=unroll)
        for i in range(n_sub):
            x_state[pl.ds(i * sub, sub)] = final[i]   # carry state to the next time chunk

    return kernel


def rollout_pallas(uproj_tm, a, x0, *, t_chunk, bb, n_sub, vmem_limit,
                   out_dtype=jnp.float32):
    """Sequential rollout; output row 0 = x0, row r>=1 = tanh(x_{r-1} @ a + uproj_tm[r]).

    uproj_tm : (T_out, batch_p, nxp) f32, time-major, padded, shifted by one step.
    a        : (nxp, nxp) weights (f32 or bf16).
    x0       : (batch_p, nxp) f32.
    """
    T_out, batch_p, nxp = uproj_tm.shape
    assert T_out % t_chunk == 0 and batch_p % bb == 0
    assert bb % 8 == 0 and nxp % 128 == 0
    assert bb % n_sub == 0 and (bb // n_sub) % 8 == 0

    unroll = 8 if t_chunk > 16 else True
    kernel = _make_rollout_kernel(t_chunk, n_sub, unroll)

    return pl.pallas_call(
        kernel,
        out_shape=jax.ShapeDtypeStruct((T_out, batch_p, nxp), out_dtype),
        grid_spec=pltpu.PrefetchScalarGridSpec(
            num_scalar_prefetch=0,
            grid=(batch_p // bb, T_out // t_chunk),
            in_specs=[
                pl.BlockSpec((t_chunk, bb, nxp), lambda b, t: (t, b, 0)),  # uproj chunk
                pl.BlockSpec((nxp, nxp), lambda b, t: (0, 0)),             # A (resident)
                pl.BlockSpec((bb, nxp), lambda b, t: (b, 0)),              # x0 shard
            ],
            out_specs=pl.BlockSpec((t_chunk, bb, nxp), lambda b, t: (t, b, 0)),
            scratch_shapes=[pltpu.VMEM((bb, nxp), jnp.float32)],           # recurrent state
        ),
        compiler_params=pltpu.CompilerParams(
            # CORRECTNESS INVARIANT: time MUST remain the innermost grid axis and MUST
            # stay "arbitrary" (sequential, never core-sharded) -- the x_state scratch
            # carries the recurrent state across time chunks.
            dimension_semantics=("parallel", "arbitrary"),
            vmem_limit_bytes=vmem_limit,
        ),
    )(uproj_tm, a, x0)


class SystemPallas:
    """JAX/Pallas equivalent of neuromancer.system.System with one dynamics node."""

    def __init__(self, a, b, bias, nstep_key="U", nsteps=None,
                 mxu_dtype=jnp.bfloat16, out_dtype=jnp.float32, t_chunk=32):
        self.nstep_key = nstep_key
        self.nsteps = nsteps
        self.input_keys = ["X", "U"]
        self.output_keys = ["X"]
        self.mxu_dtype = jnp.dtype(mxu_dtype)
        self.out_dtype = jnp.dtype(out_dtype)
        self.t_chunk = int(t_chunk)

        self.nx = int(a.shape[0])
        self.nu = int(b.shape[0])
        self.nxp = _round_up(self.nx, 128)

        a32 = jnp.asarray(a, jnp.float32)
        b32 = jnp.asarray(b, jnp.float32)
        bias32 = jnp.asarray(bias, jnp.float32).reshape(1, self.nx)

        # Lane-padded parameters (so the hoisted projection already emits lane-dense
        # tiles and the in-kernel matmul is a full (nxp, nxp) MXU tile).
        self.a_pad = (jnp.zeros((self.nxp, self.nxp), jnp.float32)
                      .at[: self.nx, : self.nx].set(a32)).astype(self.mxu_dtype)
        self.b_pad = (jnp.zeros((self.nu, self.nxp), jnp.float32)
                      .at[:, : self.nx].set(b32)).astype(self.mxu_dtype)
        self.bias_pad = jnp.zeros((1, self.nxp), jnp.float32).at[:, : self.nx].set(bias32)

        self.num_tc, self.vmem_cap = _tpu_generation_info()
        # TODO(synk): pydot graph construction / .show() / freeze()/unfreeze() /
        # reset_step() hooks have no Pallas equivalent (visualization & autograd
        # bookkeeping only); generic multi-node graphs are specialized to this node.

    def __call__(self, input_dict):
        data = dict(input_dict)
        nsteps = self.nsteps if self.nsteps is not None else data[self.nstep_key].shape[1]

        x_hist = data["X"]
        # Standard neuromancer usage: the initial 'X' entry carries a single time step,
        # so X[:, i] read by the node at step i is always the latest recurrent state.
        assert x_hist.shape[1] == 1, "SystemPallas supports (batch, 1, nx) initial state"
        x0 = x_hist[:, 0, :].astype(jnp.float32)            # (batch, nx)
        u = data["U"][:, :nsteps, :]                        # (batch, nsteps, nu)
        batch = x0.shape[0]

        batch_p = _round_up(batch, 8)
        nxp = self.nxp
        a_bytes = self.a_pad.size * self.a_pad.dtype.itemsize
        out_itemsize = self.out_dtype.itemsize

        bb, t_chunk = _plan_blocks(batch_p, nxp, a_bytes, out_itemsize,
                                   self.t_chunk, nsteps, self.num_tc, self.vmem_cap)
        n_sub = 2 if (bb >= 16 and bb % 16 == 0) else 1
        T_out = _round_up(nsteps + 1, t_chunk)              # output rows incl. the x0 row

        chunk_bytes = t_chunk * bb * nxp * (4 + out_itemsize)
        needed = 2 * a_bytes + 2 * chunk_bytes + 3 * bb * nxp * 4
        vmem_limit = int(min(self.vmem_cap * 3 // 4, max(2 * needed, 32 * 1024 * 1024)))

        # --- Hoisted control projection: ONE MXU-efficient matmul that directly emits
        #     the lane-padded, time-shifted uproj (row r drives output row r; row 0 and
        #     padded rows are never consumed by the valid outputs).
        u_tm = jnp.zeros((T_out, batch_p, self.nu), u.dtype)
        u_tm = u_tm.at[1: nsteps + 1, :batch, :].set(jnp.transpose(u, (1, 0, 2)))
        uproj = jnp.dot(
            u_tm.reshape(T_out * batch_p, self.nu).astype(self.mxu_dtype),
            self.b_pad,
            preferred_element_type=jnp.float32,
        ) + self.bias_pad
        uproj = uproj.reshape(T_out, batch_p, nxp)

        x0_p = jnp.zeros((batch_p, nxp), jnp.float32).at[:batch, : self.nx].set(x0)

        traj = rollout_pallas(uproj, self.a_pad, x0_p, t_chunk=t_chunk, bb=bb,
                              n_sub=n_sub, vmem_limit=vmem_limit,
                              out_dtype=self.out_dtype)
        # Epilogue: single fused slice+transpose (no concatenate -- the kernel already
        # wrote the x0 row).
        x_out = jnp.transpose(traj[: nsteps + 1, :batch, : self.nx], (1, 0, 2))

        out = dict(data)
        out["X"] = x_out.astype(x_hist.dtype)
        return out


def _reference_forward(input_dict, a, b, bias, nsteps):
    """Pure-JAX reimplementation of System.forward (single dynamics node)."""
    data = dict(input_dict)
    for i in range(nsteps):
        x_i = data["X"][:, i]
        u_i = data["U"][:, i]
        x_next = jnp.tanh(x_i @ a + u_i @ b + bias)
        data["X"] = jnp.concatenate([data["X"], x_next[:, None, :]], axis=1)
    return data


def _run_case(seed, batch, nsteps, nx, nu, f32_tol, bf16_tol, bf16_out_dtype=jnp.float32):
    key = jax.random.PRNGKey(seed)
    k1, k2, k3, k4, k5 = jax.random.split(key, 5)

    a_w = 0.1 * jax.random.normal(k1, (nx, nx), dtype=jnp.float32)
    b_w = 0.1 * jax.random.normal(k2, (nu, nx), dtype=jnp.float32)
    bias = 0.1 * jax.random.normal(k3, (1, nx), dtype=jnp.float32)

    x0 = jax.random.normal(k4, (batch, 1, nx), dtype=jnp.float32)
    u = jax.random.normal(k5, (batch, nsteps, nu), dtype=jnp.float32)
    input_dict = {"X": x0, "U": u}

    ref_x = jax.block_until_ready(
        _reference_forward(input_dict, a_w, b_w, bias, nsteps)["X"])

    # Exact-semantics path (f32 MXU operands).
    sys_f32 = SystemPallas(a_w, b_w, bias, nstep_key="U", mxu_dtype=jnp.float32)
    out = sys_f32(input_dict)
    out_x = jax.block_until_ready(out["X"])
    assert out_x.shape == (batch, nsteps + 1, nx), out_x.shape
    assert out["U"].shape == (batch, nsteps, nu)
    assert jnp.allclose(out_x, ref_x, atol=f32_tol, rtol=f32_tol), \
        f"f32 rollout mismatch (max err {jnp.max(jnp.abs(out_x - ref_x))})"

    # Default perf path: bf16 MXU operands, f32 accumulation / state / tanh.
    sys_bf16 = SystemPallas(a_w, b_w, bias, nstep_key="U", out_dtype=bf16_out_dtype)
    out_bf16_x = jax.block_until_ready(sys_bf16(input_dict)["X"])
    assert out_bf16_x.shape == (batch, nsteps + 1, nx)
    assert jnp.allclose(out_bf16_x, ref_x, atol=bf16_tol, rtol=bf16_tol), \
        f"bf16 rollout diverged (max err {jnp.max(jnp.abs(out_bf16_x - ref_x))})"


if __name__ == "__main__":
    # Small case (module-default shapes): single batch block, fully unrolled chunk.
    _run_case(seed=0, batch=2, nsteps=8, nx=32, nu=4, f32_tol=1e-5, bf16_tol=3e-2)
    # Larger case: exercises time padding, partial unroll (t_chunk=32), the 2-way
    # sub-chain interleave, and bf16 trajectory writeback.
    _run_case(seed=1, batch=32, nsteps=40, nx=32, nu=4, f32_tol=1e-4, bf16_tol=5e-2,
              bf16_out_dtype=jnp.bfloat16)
    print("KERNEL_OK")
</pallas_src>

<mosaic_0001>
module attributes {stable_mosaic.version = 11 : i64} {
  func.func @kernel(%arg0: i32, %arg1: i32, %arg2: memref<9x8x128xf32, #tpu.memory_space<vmem>>, %arg3: memref<128x128xf32, #tpu.memory_space<vmem>>, %arg4: memref<8x128xf32, #tpu.memory_space<vmem>>, %arg5: memref<9x8x128xf32, #tpu.memory_space<vmem>>, %arg6: memref<8x128xf32, #tpu.memory_space<vmem>>) attributes {dimension_semantics = [#tpu.dimension_semantics<parallel>, #tpu.dimension_semantics<arbitrary>], iteration_bounds = array<i64: 1, 1>, scalar_prefetch = 0 : i64, scratch_operands = 1 : i64, tpu.core_type = #tpu.core_type<tc>, window_params = [{transform_indices = @transform_0, window_bounds = array<i64: 9, 8, 128>}, {pipeline_mode = #tpu.pipeline_mode<synchronous>, transform_indices = @transform_1, window_bounds = array<i64: 128, 128>}, {transform_indices = @transform_2, window_bounds = array<i64: 8, 128>}, {transform_indices = @transform_3, window_bounds = array<i64: 9, 8, 128>}]} {
    %c0_i32 = arith.constant 0 : i32
    %0 = arith.cmpi eq, %arg1, %c0_i32 : i32
    %1 = arith.extui %0 : i1 to i32
    %c0_i32_0 = arith.constant 0 : i32
    %2 = arith.cmpi ne, %1, %c0_i32_0 : i32
    scf.if %2 {
      %c0_61 = arith.constant 0 : index
      %c0_62 = arith.constant 0 : index
      %124 = vector.load %arg4[%c0_61, %c0_62] : memref<8x128xf32, #tpu.memory_space<vmem>>, vector<8x128xf32>
      %c0_63 = arith.constant 0 : index
      %c0_64 = arith.constant 0 : index
      %125 = vector.load %arg6[%c0_63, %c0_64] : memref<8x128xf32, #tpu.memory_space<vmem>>, vector<8x128xf32>
      tpu.vector_store %arg6[%c0_63, %c0_64], %124 {strides = array<i32>} : memref<8x128xf32, #tpu.memory_space<vmem>>, vector<8x128xf32>,
    } else {
    }
    %c0 = arith.constant 0 : index
    %c0_1 = arith.constant 0 : index
    %3 = vector.load %arg3[%c0, %c0_1] : memref<128x128xf32, #tpu.memory_space<vmem>>, vector<128x128xf32>
    %c0_i32_2 = arith.constant 0 : i32
    %4 = arith.cmpi eq, %arg1, %c0_i32_2 : i32
    %c0_3 = arith.constant 0 : index
    %c0_4 = arith.constant 0 : index
    %5 = vector.load %arg6[%c0_3, %c0_4] : memref<8x128xf32, #tpu.memory_space<vmem>>, vector<8x128xf32>
    %c0_i32_5 = arith.constant 0 : i32
    %c0_i32_6 = arith.constant 0 : i32
    %6 = arith.cmpi eq, %c0_i32_5, %c0_i32_6 : i32
    %7 = arith.andi %4, %6 : i1
    %8 = arith.index_cast %c0_i32_5 : i32 to index
    %c0_7 = arith.constant 0 : index
    %c0_8 = arith.constant 0 : index
    %9 = vector.load %arg2[%8, %c0_7, %c0_8] : memref<9x8x128xf32, #tpu.memory_space<vmem>>, vector<1x8x128xf32>
    %10 = vector.shape_cast %9 : vector<1x8x128xf32> to vector<8x128xf32>
    %cst = arith.constant dense<0.000000e+00> : vector<8x128xf32>
    %11 = tpu.matmul %5, %3, %cst {dimension_numbers = #tpu.dot_dimension_numbers<[1], [0], [0], [1], [0, 0, 1, 1], [], []>} : vector<8x128xf32>, vector<128x128xf32>, vector<8x128xf32> -> vector<8x128xf32>
    %12 = arith.addf %11, %10 : vector<8x128xf32>
    %13 = math.tanh %12 : vector<8x128xf32>
    %14 = arith.select %7, %5, %13 : vector<8x128xf32>
    %15 = arith.index_cast %c0_i32_5 : i32 to index
    %c0_9 = arith.constant 0 : index
    %c0_10 = arith.constant 0 : index
    %16 = vector.load %arg5[%15, %c0_9, %c0_10] : memref<9x8x128xf32, #tpu.memory_space<vmem>>, vector<1x8x128xf32>
    %17 = vector.shape_cast %16 : vector<1x8x128xf32> to vector<8x128xf32>
    %18 = vector.shape_cast %14 : vector<8x128xf32> to vector<1x8x128xf32>
    tpu.vector_store %arg5[%15, %c0_9, %c0_10], %18 {strides = array<i32>} : memref<9x8x128xf32, #tpu.memory_space<vmem>>, vector<1x8x128xf32>,
    %c1_i32 = arith.constant 1 : i32
    %c0_i32_11 = arith.constant 0 : i32
    %19 = arith.cmpi eq, %c1_i32, %c0_i32_11 : i32
    %20 = arith.andi %4, %19 : i1
    %21 = arith.index_cast %c1_i32 : i32 to index
    %c0_12 = arith.constant 0 : index
    %c0_13 = arith.constant 0 : index
    %22 = vector.load %arg2[%21, %c0_12, %c0_13] : memref<9x8x128xf32, #tpu.memory_space<vmem>>, vector<1x8x128xf32>
    %23 = vector.shape_cast %22 : vector<1x8x128xf32> to vector<8x128xf32>
    %cst_14 = arith.constant dense<0.000000e+00> : vector<8x128xf32>
    %24 = tpu.matmul %14, %3, %cst_14 {dimension_numbers = #tpu.dot_dimension_numbers<[1], [0], [0], [1], [0, 0, 1, 1], [], []>} : vector<8x128xf32>, vector<128x128xf32>, vector<8x128xf32> -> vector<8x128xf32>
    %25 = arith.addf %24, %23 : vector<8x128xf32>
    %26 = math.tanh %25 : vector<8x128xf32>
    %27 = arith.select %20, %14, %26 : vector<8x128xf32>
    %28 = arith.index_cast %c1_i32 : i32 to index
    %c0_15 = arith.constant 0 : index
    %c0_16 = arith.constant 0 : index
    %29 = vector.load %arg5[%28, %c0_15, %c0_16] : memref<9x8x128xf32, #tpu.memory_space<vmem>>, vector<1x8x128xf32>
    %30 = vector.shape_cast %29 : vector<1x8x128xf32> to vector<8x128xf32>
    %31 = vector.shape_cast %27 : vector<8x128xf32> to vector<1x8x128xf32>
    tpu.vector_store %arg5[%28, %c0_15, %c0_16], %31 {strides = array<i32>} : memref<9x8x128xf32, #tpu.memory_space<vmem>>, vector<1x8x128xf32>,
    %c2_i32 = arith.constant 2 : i32
    %c0_i32_17 = arith.constant 0 : i32
    %32 = arith.cmpi eq, %c2_i32, %c0_i32_17 : i32
    %33 = arith.andi %4, %32 : i1
    %34 = arith.index_cast %c2_i32 : i32 to index
    %c0_18 = arith.constant 0 : index
    %c0_19 = arith.constant 0 : index
    %35 = vector.load %arg2[%34, %c0_18, %c0_19] : memref<9x8x128xf32, #tpu.memory_space<vmem>>, vector<1x8x128xf32>
    %36 = vector.shape_cast %35 : vector<1x8x128xf32> to vector<8x128xf32>
    %cst_20 = arith.constant dense<0.000000e+00> : vector<8x128xf32>
    %37 = tpu.matmul %27, %3, %cst_20 {dimension_numbers = #tpu.dot_dimension_numbers<[1], [0], [0], [1], [0, 0, 1, 1], [], []>} : vector<8x128xf32>, vector<128x128xf32>, vector<8x128xf32> -> vector<8x128xf32>
    %38 = arith.addf %37, %36 : vector<8x128xf32>
    %39 = math.tanh %38 : vector<8x128xf32>
    %40 = arith.select %33, %27, %39 : vector<8x128xf32>
    %41 = arith.index_cast %c2_i32 : i32 to index
    %c0_21 = arith.constant 0 : index
    %c0_22 = arith.constant 0 : index
    %42 = vector.load %arg5[%41, %c0_21, %c0_22] : memref<9x8x128xf32, #tpu.memory_space<vmem>>, vector<1x8x128xf32>
    %43 = vector.shape_cast %42 : vector<1x8x128xf32> to vector<8x128xf32>
    %44 = vector.shape_cast %40 : vector<8x128xf32> to vector<1x8x128xf32>
    tpu.vector_store %arg5[%41, %c0_21, %c0_22], %44 {strides = array<i32>} : memref<9x8x128xf32, #tpu.memory_space<vmem>>, vector<1x8x128xf32>,
    %c3_i32 = arith.constant 3 : i32
    %c0_i32_23 = arith.constant 0 : i32
    %45 = arith.cmpi eq, %c3_i32, %c0_i32_23 : i32
    %46 = arith.andi %4, %45 : i1
    %47 = arith.index_cast %c3_i32 : i32 to index
    %c0_24 = arith.constant 0 : index
    %c0_25 = arith.constant 0 : index
    %48 = vector.load %arg2[%47, %c0_24, %c0_25] : memref<9x8x128xf32, #tpu.memory_space<vmem>>, vector<1x8x128xf32>
    %49 = vector.shape_cast %48 : vector<1x8x128xf32> to vector<8x128xf32>
    %cst_26 = arith.constant dense<0.000000e+00> : vector<8x128xf32>
    %50 = tpu.matmul %40, %3, %cst_26 {dimension_numbers = #tpu.dot_dimension_numbers<[1], [0], [0], [1], [0, 0, 1, 1], [], []>} : vector<8x128xf32>, vector<128x128xf32>, vector<8x128xf32> -> vector<8x128xf32>
    %51 = arith.addf %50, %49 : vector<8x128xf32>
    %52 = math.tanh %51 : vector<8x128xf32>
    %53 = arith.select %46, %40, %52 : vector<8x128xf32>
    %54 = arith.index_cast %c3_i32 : i32 to index
    %c0_27 = arith.constant 0 : index
    %c0_28 = arith.constant 0 : index
    %55 = vector.load %arg5[%54, %c0_27, %c0_28] : memref<9x8x128xf32, #tpu.memory_space<vmem>>, vector<1x8x128xf32>
    %56 = vector.shape_cast %55 : vector<1x8x128xf32> to vector<8x128xf32>
    %57 = vector.shape_cast %53 : vector<8x128xf32> to vector<1x8x128xf32>
    tpu.vector_store %arg5[%54, %c0_27, %c0_28], %57 {strides = array<i32>} : memref<9x8x128xf32, #tpu.memory_space<vmem>>, vector<1x8x128xf32>,
    %c4_i32 = arith.constant 4 : i32
    %c0_i32_29 = arith.constant 0 : i32
    %58 = arith.cmpi eq, %c4_i32, %c0_i32_29 : i32
    %59 = arith.andi %4, %58 : i1
    %60 = arith.index_cast %c4_i32 : i32 to index
    %c0_30 = arith.constant 0 : index
    %c0_31 = arith.constant 0 : index
    %61 = vector.load %arg2[%60, %c0_30, %c0_31] : memref<9x8x128xf32, #tpu.memory_space<vmem>>, vector<1x8x128xf32>
    %62 = vector.shape_cast %61 : vector<1x8x128xf32> to vector<8x128xf32>
    %cst_32 = arith.constant dense<0.000000e+00> : vector<8x128xf32>
    %63 = tpu.matmul %53, %3, %cst_32 {dimension_numbers = #tpu.dot_dimension_numbers<[1], [0], [0], [1], [0, 0, 1, 1], [], []>} : vector<8x128xf32>, vector<128x128xf32>, vector<8x128xf32> -> vector<8x128xf32>
    %64 = arith.addf %63, %62 : vector<8x128xf32>
    %65 = math.tanh %64 : vector<8x128xf32>
    %66 = arith.select %59, %53, %65 : vector<8x128xf32>
    %67 = arith.index_cast %c4_i32 : i32 to index
    %c0_33 = arith.constant 0 : index
    %c0_34 = arith.constant 0 : index
    %68 = vector.load %arg5[%67, %c0_33, %c0_34] : memref<9x8x128xf32, #tpu.memory_space<vmem>>, vector<1x8x128xf32>
    %69 = vector.shape_cast %68 : vector<1x8x128xf32> to vector<8x128xf32>
    %70 = vector.shape_cast %66 : vector<8x128xf32> to vector<1x8x128xf32>
    tpu.vector_store %arg5[%67, %c0_33, %c0_34], %70 {strides = array<i32>} : memref<9x8x128xf32, #tpu.memory_space<vmem>>, vector<1x8x128xf32>,
    %c5_i32 = arith.constant 5 : i32
    %c0_i32_35 = arith.constant 0 : i32
    %71 = arith.cmpi eq, %c5_i32, %c0_i32_35 : i32
    %72 = arith.andi %4, %71 : i1
    %73 = arith.index_cast %c5_i32 : i32 to index
    %c0_36 = arith.constant 0 : index
    %c0_37 = arith.constant 0 : index
    %74 = vector.load %arg2[%73, %c0_36, %c0_37] : memref<9x8x128xf32, #tpu.memory_space<vmem>>, vector<1x8x128xf32>
    %75 = vector.shape_cast %74 : vector<1x8x128xf32> to vector<8x128xf32>
    %cst_38 = arith.constant dense<0.000000e+00> : vector<8x128xf32>
    %76 = tpu.matmul %66, %3, %cst_38 {dimension_numbers = #tpu.dot_dimension_numbers<[1], [0], [0], [1], [0, 0, 1, 1], [], []>} : vector<8x128xf32>, vector<128x128xf32>, vector<8x128xf32> -> vector<8x128xf32>
    %77 = arith.addf %76, %75 : vector<8x128xf32>
    %78 = math.tanh %77 : vector<8x128xf32>
    %79 = arith.select %72, %66, %78 : vector<8x128xf32>
    %80 = arith.index_cast %c5_i32 : i32 to index
    %c0_39 = arith.constant 0 : index
    %c0_40 = arith.constant 0 : index
    %81 = vector.load %arg5[%80, %c0_39, %c0_40] : memref<9x8x128xf32, #tpu.memory_space<vmem>>, vector<1x8x128xf32>
    %82 = vector.shape_cast %81 : vector<1x8x128xf32> to vector<8x128xf32>
    %83 = vector.shape_cast %79 : vector<8x128xf32> to vector<1x8x128xf32>
    tpu.vector_store %arg5[%80, %c0_39, %c0_40], %83 {strides = array<i32>} : memref<9x8x128xf32, #tpu.memory_space<vmem>>, vector<1x8x128xf32>,
    %c6_i32 = arith.constant 6 : i32
    %c0_i32_41 = arith.constant 0 : i32
    %84 = arith.cmpi eq, %c6_i32, %c0_i32_41 : i32
    %85 = arith.andi %4, %84 : i1
    %86 = arith.index_cast %c6_i32 : i32 to index
    %c0_42 = arith.constant 0 : index
    %c0_43 = arith.constant 0 : index
    %87 = vector.load %arg2[%86, %c0_42, %c0_43] : memref<9x8x128xf32, #tpu.memory_space<vmem>>, vector<1x8x128xf32>
    %88 = vector.shape_cast %87 : vector<1x8x128xf32> to vector<8x128xf32>
    %cst_44 = arith.constant dense<0.000000e+00> : vector<8x128xf32>
    %89 = tpu.matmul %79, %3, %cst_44 {dimension_numbers = #tpu.dot_dimension_numbers<[1], [0], [0], [1], [0, 0, 1, 1], [], []>} : vector<8x128xf32>, vector<128x128xf32>, vector<8x128xf32> -> vector<8x128xf32>
    %90 = arith.addf %89, %88 : vector<8x128xf32>
    %91 = math.tanh %90 : vector<8x128xf32>
    %92 = arith.select %85, %79, %91 : vector<8x128xf32>
    %93 = arith.index_cast %c6_i32 : i32 to index
    %c0_45 = arith.constant 0 : index
    %c0_46 = arith.constant 0 : index
    %94 = vector.load %arg5[%93, %c0_45, %c0_46] : memref<9x8x128xf32, #tpu.memory_space<vmem>>, vector<1x8x128xf32>
    %95 = vector.shape_cast %94 : vector<1x8x128xf32> to vector<8x128xf32>
    %96 = vector.shape_cast %92 : vector<8x128xf32> to vector<1x8x128xf32>
    tpu.vector_store %arg5[%93, %c0_45, %c0_46], %96 {strides = array<i32>} : memref<9x8x128xf32, #tpu.memory_space<vmem>>, vector<1x8x128xf32>,
    %c7_i32 = arith.constant 7 : i32
    %c0_i32_47 = arith.constant 0 : i32
    %97 = arith.cmpi eq, %c7_i32, %c0_i32_47 : i32
    %98 = arith.andi %4, %97 : i1
    %99 = arith.index_cast %c7_i32 : i32 to index
    %c0_48 = arith.constant 0 : index
    %c0_49 = arith.constant 0 : index
    %100 = vector.load %arg2[%99, %c0_48, %c0_49] : memref<9x8x128xf32, #tpu.memory_space<vmem>>, vector<1x8x128xf32>
    %101 = vector.shape_cast %100 : vector<1x8x128xf32> to vector<8x128xf32>
    %cst_50 = arith.constant dense<0.000000e+00> : vector<8x128xf32>
    %102 = tpu.matmul %92, %3, %cst_50 {dimension_numbers = #tpu.dot_dimension_numbers<[1], [0], [0], [1], [0, 0, 1, 1], [], []>} : vector<8x128xf32>, vector<128x128xf32>, vector<8x128xf32> -> vector<8x128xf32>
    %103 = arith.addf %102, %101 : vector<8x128xf32>
    %104 = math.tanh %103 : vector<8x128xf32>
    %105 = arith.select %98, %92, %104 : vector<8x128xf32>
    %106 = arith.index_cast %c7_i32 : i32 to index
    %c0_51 = arith.constant 0 : index
    %c0_52 = arith.constant 0 : index
    %107 = vector.load %arg5[%106, %c0_51, %c0_52] : memref<9x8x128xf32, #tpu.memory_space<vmem>>, vector<1x8x128xf32>
    %108 = vector.shape_cast %107 : vector<1x8x128xf32> to vector<8x128xf32>
    %109 = vector.shape_cast %105 : vector<8x128xf32> to vector<1x8x128xf32>
    tpu.vector_store %arg5[%106, %c0_51, %c0_52], %109 {strides = array<i32>} : memref<9x8x128xf32, #tpu.memory_space<vmem>>, vector<1x8x128xf32>,
    %c8_i32 = arith.constant 8 : i32
    %c0_i32_53 = arith.constant 0 : i32
    %110 = arith.cmpi eq, %c8_i32, %c0_i32_53 : i32
    %111 = arith.andi %4, %110 : i1
    %112 = arith.index_cast %c8_i32 : i32 to index
    %c0_54 = arith.constant 0 : index
    %c0_55 = arith.constant 0 : index
    %113 = vector.load %arg2[%112, %c0_54, %c0_55] : memref<9x8x128xf32, #tpu.memory_space<vmem>>, vector<1x8x128xf32>
    %114 = vector.shape_cast %113 : vector<1x8x128xf32> to vector<8x128xf32>
    %cst_56 = arith.constant dense<0.000000e+00> : vector<8x128xf32>
    %115 = tpu.matmul %105, %3, %cst_56 {dimension_numbers = #tpu.dot_dimension_numbers<[1], [0], [0], [1], [0, 0, 1, 1], [], []>} : vector<8x128xf32>, vector<128x128xf32>, vector<8x128xf32> -> vector<8x128xf32>
    %116 = arith.addf %115, %114 : vector<8x128xf32>
    %117 = math.tanh %116 : vector<8x128xf32>
    %118 = arith.select %111, %105, %117 : vector<8x128xf32>
    %119 = arith.index_cast %c8_i32 : i32 to index
    %c0_57 = arith.constant 0 : index
    %c0_58 = arith.constant 0 : index
    %120 = vector.load %arg5[%119, %c0_57, %c0_58] : memref<9x8x128xf32, #tpu.memory_space<vmem>>, vector<1x8x128xf32>
    %121 = vector.shape_cast %120 : vector<1x8x128xf32> to vector<8x128xf32>
    %122 = vector.shape_cast %118 : vector<8x128xf32> to vector<1x8x128xf32>
    tpu.vector_store %arg5[%119, %c0_57, %c0_58], %122 {strides = array<i32>} : memref<9x8x128xf32, #tpu.memory_space<vmem>>, vector<1x8x128xf32>,
    %c9_i32 = arith.constant 9 : i32
    %c0_59 = arith.constant 0 : index
    %c0_60 = arith.constant 0 : index
    %123 = vector.load %arg6[%c0_59, %c0_60] : memref<8x128xf32, #tpu.memory_space<vmem>>, vector<8x128xf32>
    tpu.vector_store %arg6[%c0_59, %c0_60], %118 {strides = array<i32>} : memref<8x128xf32, #tpu.memory_space<vmem>>, vector<8x128xf32>,
    return
  }
  func.func @transform_0(%arg0: i32, %arg1: i32) -> (i32, i32, i32) {
    %c0_i32 = arith.constant 0 : i32
    %c0_i32_0 = arith.constant 0 : i32
    return %arg1, %arg0, %c0_i32 : i32, i32, i32
  }
  func.func @transform_1(%arg0: i32, %arg1: i32) -> (i32, i32) {
    %c0_i32 = arith.constant 0 : i32
    %c0_i32_0 = arith.constant 0 : i32
    %c0_i32_1 = arith.constant 0 : i32
    return %c0_i32, %c0_i32_0 : i32, i32
  }
  func.func @transform_2(%arg0: i32, %arg1: i32) -> (i32, i32) {
    %c0_i32 = arith.constant 0 : i32
    %c0_i32_0 = arith.constant 0 : i32
    return %arg0, %c0_i32 : i32, i32
  }
  func.func @transform_3(%arg0: i32, %arg1: i32) -> (i32, i32, i32) {
    %c0_i32 = arith.constant 0 : i32
    %c0_i32_0 = arith.constant 0 : i32
    return %arg1, %arg0, %c0_i32 : i32, i32, i32
  }
}

</mosaic_0001>

<llo_original>
// kernel: tpu_custom_call.1
$region0: #{tpu_custom_call.1}
  #allocation0 [shape = 'u32[]', space=smem, size = 0x4, offset = 0x4, fixed_abs, tag = 'smem constant byte address 0x4 - core index']
  #allocation1 [shape = 'u32[144,128]{1,0:T(1,128)}', space=vmem, size = 0x12000, scoped, tag = 'internal scratch']
  #allocation2 [shape = 'f32[8,128]{1,0:T(8,128)}', space=vmem, size = 0x1000, scoped, tag = 'scratch operand']
  %s0 = inlined_call_operand.hbm [shape: f32[9,8,128], index: 0, kind: input, shape index: {}]
  %s1 = inlined_call_operand.hbm [shape: f32[128,128], index: 1, kind: input, shape index: {}]
  %s2 = inlined_call_operand.hbm [shape: f32[8,128], index: 2, kind: input, shape index: {}]
  %s3 = inlined_call_operand.hbm [shape: f32[9,8,128], index: 3, kind: output, shape index: {}]
  %s4 = sld [smem:[#allocation0]]
  $region38: #{tpu_custom_call.1} parent=0
    _
  %s6 = ssub.s32 1, %s4
  %s7 = scalar_select 0, %s6, %s4
  $region1: #{tpu_custom_call.1} parent=0
    #allocation3 [shape = 'u8[36864]{0}', space=vmem, size = 0x9000, scoped, tag = 'input window, operand 0, single buffered']
    #allocation4 [shape = 's32[1]{0}', space=sflag, size = 0x4, scoped, tag = 'scoped memory for tpu_custom_call.1']
    #allocation5 [shape = 's32[1]{0}', space=sflag, size = 0x4, scoped, tag = 'scoped memory for tpu_custom_call.1']
    #allocation6 [shape = 'u8[65536]{0}', space=vmem, size = 0x10000, scoped, tag = 'input window, operand 1, single buffered']
    #allocation7 [shape = 's32[1]{0}', space=sflag, size = 0x4, scoped, tag = 'scoped memory for tpu_custom_call.1']
    #allocation8 [shape = 'u8[4096]{0}', space=vmem, size = 0x1000, scoped, tag = 'input window, operand 2, single buffered']
    #allocation9 [shape = 'u8[36864]{0}', space=vmem, size = 0x9000, scoped, tag = 'output window, operand 0, single buffered']
    %8 = vsyncpa [#allocation4], 0
    %9 = vsyncpa [#allocation7], 0
    %10 = vsyncpa [#allocation5], 0
    // Predicated region
    $region2: #{tpu_custom_call.1} parent=1 // pred_check
      _
    $region3: #{tpu_custom_call.1} parent=1 // pred_check_branch
      %12 = sbr.rel (0) target = $region5
    $region4: #{tpu_custom_call.1} parent=1 // pred_region
      %s14 = ssub.s32 1152, 1152
      %15 = vsyncadd [#allocation4], %s14
      %s16 = sshll.u32 [#allocation3], 4
      %s17 = int_to_ptr.vmem [resolvable:$true] %s16
      %22 = dma.hbm_to_vmem [thread:$0]  %s0, 1152, %s17, [#allocation4], 128, 128, 8
    $region5: #{tpu_custom_call.1} parent=1 // pred_fallthru
      _
    // Predicated region
    $region6: #{tpu_custom_call.1} parent=1 // pred_check
      _
    $region7: #{tpu_custom_call.1} parent=1 // pred_check_branch
      %24 = sbr.rel (0) target = $region9
    $region8: #{tpu_custom_call.1} parent=1 // pred_region
      %s26 = ssub.s32 2048, 2048
      %27 = vsyncadd [#allocation7], %s26
      %s28 = sshll.u32 [#allocation6], 4
      %s29 = int_to_ptr.vmem [resolvable:$true] %s28
      %34 = dma.hbm_to_vmem [thread:$0]  %s1, 2048, %s29, [#allocation7], 128, 128, 8
    $region9: #{tpu_custom_call.1} parent=1 // pred_fallthru
      _
    // Predicated region
    $region10: #{tpu_custom_call.1} parent=1 // pred_check
      _
    $region11: #{tpu_custom_call.1} parent=1 // pred_check_branch
      %36 = sbr.rel (0) target = $region13
    $region12: #{tpu_custom_call.1} parent=1 // pred_region
      %s38 = ssub.s32 128, 128
      %39 = vsyncadd [#allocation7], %s38
      %s41 = sshll.u32 [#allocation8], 4
      %s42 = int_to_ptr.vmem [resolvable:$true] %s41
      %44 = dma.hbm_to_vmem [thread:$0]  %s2, 128, %s42, [#allocation7]
    $region13: #{tpu_custom_call.1} parent=1 // pred_fallthru
      _
    // Predicated region
    $region14: #{tpu_custom_call.1} parent=1 // pred_check
      _
    $region15: #{tpu_custom_call.1} parent=1 // pred_check_branch
      %46 = sbr.rel (0) target = $region17
    $region16: #{tpu_custom_call.1} parent=1 // pred_region
      %47 = dma.done [#allocation4], 1152
    $region17: #{tpu_custom_call.1} parent=1 // pred_fallthru
      _
    // Predicated region
    $region18: #{tpu_custom_call.1} parent=1 // pred_check
      _
    $region19: #{tpu_custom_call.1} parent=1 // pred_check_branch
      %49 = sbr.rel (0) target = $region21
    $region20: #{tpu_custom_call.1} parent=1 // pred_region
      %50 = dma.done [#allocation7], 2048
    $region21: #{tpu_custom_call.1} parent=1 // pred_fallthru
      _
    // Predicated region
    $region22: #{tpu_custom_call.1} parent=1 // pred_check
      _
    $region23: #{tpu_custom_call.1} parent=1 // pred_check_branch
      %52 = sbr.rel (0) target = $region25
    $region24: #{tpu_custom_call.1} parent=1 // pred_region
      %53 = dma.done [#allocation7], 128
    $region25: #{tpu_custom_call.1} parent=1 // pred_fallthru
      _
    %p54 = scmp.eq.s32.totalorder 0, 0
    // Predicated region
    $region26: #{tpu_custom_call.1} parent=1 // pred_check
      %p55 = pneg %p54
    $region27: #{tpu_custom_call.1} parent=1 // pred_check_branch
      %57 = sbr.rel (%p55) target = $region29
    $region28: #{tpu_custom_call.1} parent=1 // pred_region
      %v58 = vld [vmem:[#allocation8] sm:$0xff]
      %59 = vst [vmem:[#allocation2] sm:$0xff] %v58
    $region29: #{tpu_custom_call.1} parent=1 // pred_fallthru
      _
    %v60 = vld [vmem:[#allocation6] sm:$0xff]
    %v61 = vld [vmem:[#allocation6 + $0x8] sm:$0xff]
    %v62 = vld [vmem:[#allocation6 + $0x10] sm:$0xff]
    %v63 = vld [vmem:[#allocation6 + $0x18] sm:$0xff]
    %v64 = vld [vmem:[#allocation6 + $0x20] sm:$0xff]
    %v65 = vld [vmem:[#allocation6 + $0x28] sm:$0xff]
    %v66 = vld [vmem:[#allocation6 + $0x30] sm:$0xff]
    %v67 = vld [vmem:[#allocation6 + $0x38] sm:$0xff]
    %v68 = vld [vmem:[#allocation6 + $0x40] sm:$0xff]
    %v69 = vld [vmem:[#allocation6 + $0x48] sm:$0xff]
    %v70 = vld [vmem:[#allocation6 + $0x50] sm:$0xff]
    %v71 = vld [vmem:[#allocation6 + $0x58] sm:$0xff]
    %v72 = vld [vmem:[#allocation6 + $0x60] sm:$0xff]
    %v73 = vld [vmem:[#allocation6 + $0x68] sm:$0xff]
    %v74 = vld [vmem:[#allocation6 + $0x70] sm:$0xff]
    %v75 = vld [vmem:[#allocation6 + $0x78] sm:$0xff]
    %v76 = vld [vmem:[#allocation2] sm:$0xff]
    %v77 = vld [vmem:[#allocation3] sm:$0xff]
    %78 = vmatprep.subr.mxu0 0.0
    %79 = vmatpush1.msra.mxu0 %v60
    %80 = vmatprep.subr.mxu0 0.0
    %81 = vmatpush1.msra.mxu0 %v61
    %82 = vmatprep.subr.mxu0 0.0
    %83 = vmatpush1.msra.mxu0 %v62
    %84 = vmatprep.subr.mxu0 0.0
    %85 = vmatpush1.msra.mxu0 %v63
    %86 = vmatprep.subr.mxu0 0.0
    %87 = vmatpush1.msra.mxu0 %v64
    %88 = vmatprep.subr.mxu0 0.0
    %89 = vmatpush1.msra.mxu0 %v65
    %90 = vmatprep.subr.mxu0 0.0
    %91 = vmatpush1.msra.mxu0 %v66
    %92 = vmatprep.subr.mxu0 0.0
    %93 = vmatpush1.msra.mxu0 %v67
    %94 = vmatprep.subr.mxu0 0.0
    %95 = vmatpush1.msra.mxu0 %v68
    %96 = vmatprep.subr.mxu0 0.0
    %97 = vmatpush1.msra.mxu0 %v69
    %98 = vmatprep.subr.mxu0 0.0
    %99 = vmatpush1.msra.mxu0 %v70
    %100 = vmatprep.subr.mxu0 0.0
    %101 = vmatpush1.msra.mxu0 %v71
    %102 = vmatprep.subr.mxu0 0.0
    %103 = vmatpush1.msra.mxu0 %v72
    %104 = vmatprep.subr.mxu0 0.0
    %105 = vmatpush1.msra.mxu0 %v73
    %106 = vmatprep.subr.mxu0 0.0
    %107 = vmatpush1.msra.mxu0 %v74
    %108 = vmatprep.subr.mxu0 0.0
    %109 = vmatpush1.msra.mxu0 %v75
    %110 = vmatprep.subr.mxu0 0.0
    %111 = vmatpush1.msra.mxu0 0.0
    %112 = vmatprep.subr.mxu0 0.0
    %113 = vmatpush1.msra.mxu0 0.0
    %114 = vmatprep.subr.mxu0 0.0
    %115 = vmatpush1.msra.mxu0 0.0
    %116 = vmatprep.subr.mxu0 0.0
    %117 = vmatpush1.msra.mxu0 0.0
    %118 = vmatprep.subr.mxu0 0.0
    %119 = vmatpush1.msra.mxu0 0.0
    %120 = vmatprep.subr.mxu0 0.0
    %121 = vmatpush1.msra.mxu0 0.0
    %122 = vmatprep.subr.mxu0 0.0
    %123 = vmatpush1.msra.mxu0 0.0
    %124 = vmatprep.subr.mxu0 0.0
    %125 = vmatpush1.msra.mxu0 0.0
    %126 = vmatprep.subr.mxu0 0.0
    %127 = vmatpush1.msra.mxu0 0.0
    %128 = vmatprep.subr.mxu0 0.0
    %129 = vmatpush1.msra.mxu0 0.0
    %130 = vmatprep.subr.mxu0 0.0
    %131 = vmatpush1.msra.mxu0 0.0
    %132 = vmatprep.subr.mxu0 0.0
    %133 = vmatpush1.msra.mxu0 0.0
    %134 = vmatprep.subr.mxu0 0.0
    %135 = vmatpush1.msra.mxu0 0.0
    %136 = vmatprep.subr.mxu0 0.0
    %137 = vmatpush1.msra.mxu0 0.0
    %138 = vmatprep.subr.mxu0 0.0
    %139 = vmatpush1.msra.mxu0 0.0
    %140 = vmatprep.subr.mxu0 0.0
    %141 = vmatpush1.msra.mxu0 0.0
    %142 = vmatprep.mubr.f32.mxu0 0.0
    %143 = vmatmul.mubr.f32.gmra.mrb[0].mxu0 %v76
    %v144 = vpop.f32.mrb[0].mxu0
    %v145 = vadd.f32 %v77, %v144
    %v146 = vpop.f32.mrb[0].mxu0
    %147 = vdwg.mxu0
    %v148 = vtanh.pop %v145
    %s149 = scalar_select %p54, 1, 0
    %v150 = vstv %s149
    %vm151 = vcmp.eq.s32.totalorder %v150, 1
    %v152 = vsel %vm151, %v76, %v148
    %153 = vst [vmem:[#allocation9] sm:$0xff] %v152
    %s154 = scalar_lea.vmem [#allocation3], 8
    %v155 = vld [vmem:[%s154] sm:$0xff]
    %156 = vmatprep.subr.mxu0 0.0
    %157 = vmatpush1.msra.mxu0 %v60
    %158 = vmatprep.subr.mxu0 0.0
    %159 = vmatpush1.msra.mxu0 %v61
    %160 = vmatprep.subr.mxu0 0.0
    %161 = vmatpush1.msra.mxu0 %v62
    %162 = vmatprep.subr.mxu0 0.0
    %163 = vmatpush1.msra.mxu0 %v63
    %164 = vmatprep.subr.mxu0 0.0
    %165 = vmatpush1.msra.mxu0 %v64
    %166 = vmatprep.subr.mxu0 0.0
    %167 = vmatpush1.msra.mxu0 %v65
    %168 = vmatprep.subr.mxu0 0.0
    %169 = vmatpush1.msra.mxu0 %v66
    %170 = vmatprep.subr.mxu0 0.0
    %171 = vmatpush1.msra.mxu0 %v67
    %172 = vmatprep.subr.mxu0 0.0
    %173 = vmatpush1.msra.mxu0 %v68
    %174 = vmatprep.subr.mxu0 0.0
    %175 = vmatpush1.msra.mxu0 %v69
    %176 = vmatprep.subr.mxu0 0.0
    %177 = vmatpush1.msra.mxu0 %v70
    %178 = vmatprep.subr.mxu0 0.0
    %179 = vmatpush1.msra.mxu0 %v71
    %180 = vmatprep.subr.mxu0 0.0
    %181 = vmatpush1.msra.mxu0 %v72
    %182 = vmatprep.subr.mxu0 0.0
    %183 = vmatpush1.msra.mxu0 %v73
    %184 = vmatprep.subr.mxu0 0.0
    %185 = vmatpush1.msra.mxu0 %v74
    %186 = vmatprep.subr.mxu0 0.0
    %187 = vmatpush1.msra.mxu0 %v75
    %188 = vmatprep.subr.mxu0 0.0
    %189 = vmatpush1.msra.mxu0 0.0
    %190 = vmatprep.subr.mxu0 0.0
    %191 = vmatpush1.msra.mxu0 0.0
    %192 = vmatprep.subr.mxu0 0.0
    %193 = vmatpush1.msra.mxu0 0.0
    %194 = vmatprep.subr.mxu0 0.0
    %195 = vmatpush1.msra.mxu0 0.0
    %196 = vmatprep.subr.mxu0 0.0
    %197 = vmatpush1.msra.mxu0 0.0
    %198 = vmatprep.subr.mxu0 0.0
    %199 = vmatpush1.msra.mxu0 0.0
    %200 = vmatprep.subr.mxu0 0.0
    %201 = vmatpush1.msra.mxu0 0.0
    %202 = vmatprep.subr.mxu0 0.0
    %203 = vmatpush1.msra.mxu0 0.0
    %204 = vmatprep.subr.mxu0 0.0
    %205 = vmatpush1.msra.mxu0 0.0
    %206 = vmatprep.subr.mxu0 0.0
    %207 = vmatpush1.msra.mxu0 0.0
    %208 = vmatprep.subr.mxu0 0.0
    %209 = vmatpush1.msra.mxu0 0.0
    %210 = vmatprep.subr.mxu0 0.0
    %211 = vmatpush1.msra.mxu0 0.0
    %212 = vmatprep.subr.mxu0 0.0
    %213 = vmatpush1.msra.mxu0 0.0
    %214 = vmatprep.subr.mxu0 0.0
    %215 = vmatpush1.msra.mxu0 0.0
    %216 = vmatprep.subr.mxu0 0.0
    %217 = vmatpush1.msra.mxu0 0.0
    %218 = vmatprep.subr.mxu0 0.0
    %219 = vmatpush1.msra.mxu0 0.0
    %220 = vmatprep.mubr.f32.mxu0 0.0
    %221 = vmatmul.mubr.f32.gmra.mrb[0].mxu0 %v152
    %v222 = vpop.f32.mrb[0].mxu0
    %v223 = vadd.f32 %v155, %v222
    %v224 = vpop.f32.mrb[0].mxu0
    %225 = vdwg.mxu0
    %v226 = vtanh.pop %v223
    %s227 = scalar_lea.vmem [#allocation9], 8
    %228 = vst [vmem:[%s227] sm:$0xff] %v226
    %s229 = scalar_lea.vmem [#allocation3], 16
    %v230 = vld [vmem:[%s229] sm:$0xff]
    %231 = vmatprep.subr.mxu0 0.0
    %232 = vmatpush1.msra.mxu0 %v60
    %233 = vmatprep.subr.mxu0 0.0
    %234 = vmatpush1.msra.mxu0 %v61
    %235 = vmatprep.subr.mxu0 0.0
    %236 = vmatpush1.msra.mxu0 %v62
    %237 = vmatprep.subr.mxu0 0.0
    %238 = vmatpush1.msra.mxu0 %v63
    %239 = vmatprep.subr.mxu0 0.0
    %240 = vmatpush1.msra.mxu0 %v64
    %241 = vmatprep.subr.mxu0 0.0
    %242 = vmatpush1.msra.mxu0 %v65
    %243 = vmatprep.subr.mxu0 0.0
    %244 = vmatpush1.msra.mxu0 %v66
    %245 = vmatprep.subr.mxu0 0.0
    %246 = vmatpush1.msra.mxu0 %v67
    %247 = vmatprep.subr.mxu0 0.0
    %248 = vmatpush1.msra.mxu0 %v68
    %249 = vmatprep.subr.mxu0 0.0
    %250 = vmatpush1.msra.mxu0 %v69
    %251 = vmatprep.subr.mxu0 0.0
    %252 = vmatpush1.msra.mxu0 %v70
    %253 = vmatprep.subr.mxu0 0.0
    %254 = vmatpush1.msra.mxu0 %v71
    %255 = vmatprep.subr.mxu0 0.0
    %256 = vmatpush1.msra.mxu0 %v72
    %257 = vmatprep.subr.mxu0 0.0
    %258 = vmatpush1.msra.mxu0 %v73
    %259 = vmatprep.subr.mxu0 0.0
    %260 = vmatpush1.msra.mxu0 %v74
    %261 = vmatprep.subr.mxu0 0.0
    %262 = vmatpush1.msra.mxu0 %v75
    %263 = vmatprep.subr.mxu0 0.0
    %264 = vmatpush1.msra.mxu0 0.0
    %265 = vmatprep.subr.mxu0 0.0
    %266 = vmatpush1.msra.mxu0 0.0
    %267 = vmatprep.subr.mxu0 0.0
    %268 = vmatpush1.msra.mxu0 0.0
    %269 = vmatprep.subr.mxu0 0.0
    %270 = vmatpush1.msra.mxu0 0.0
    %271 = vmatprep.subr.mxu0 0.0
    %272 = vmatpush1.msra.mxu0 0.0
    %273 = vmatprep.subr.mxu0 0.0
    %274 = vmatpush1.msra.mxu0 0.0
    %275 = vmatprep.subr.mxu0 0.0
    %276 = vmatpush1.msra.mxu0 0.0
    %277 = vmatprep.subr.mxu0 0.0
    %278 = vmatpush1.msra.mxu0 0.0
    %279 = vmatprep.subr.mxu0 0.0
    %280 = vmatpush1.msra.mxu0 0.0
    %281 = vmatprep.subr.mxu0 0.0
    %282 = vmatpush1.msra.mxu0 0.0
    %283 = vmatprep.subr.mxu0 0.0
    %284 = vmatpush1.msra.mxu0 0.0
    %285 = vmatprep.subr.mxu0 0.0
    %286 = vmatpush1.msra.mxu0 0.0
    %287 = vmatprep.subr.mxu0 0.0
    %288 = vmatpush1.msra.mxu0 0.0
    %289 = vmatprep.subr.mxu0 0.0
    %290 = vmatpush1.msra.mxu0 0.0
    %291 = vmatprep.subr.mxu0 0.0
    %292 = vmatpush1.msra.mxu0 0.0
    %293 = vmatprep.subr.mxu0 0.0
    %294 = vmatpush1.msra.mxu0 0.0
    %295 = vmatprep.mubr.f32.mxu0 0.0
    %296 = vmatmul.mubr.f32.gmra.mrb[0].mxu0 %v226
    %v297 = vpop.f32.mrb[0].mxu0
    %v298 = vadd.f32 %v230, %v297
    %v299 = vpop.f32.mrb[0].mxu0
    %300 = vdwg.mxu0
    %v301 = vtanh.pop %v298
    %s302 = scalar_lea.vmem [#allocation9], 16
    %303 = vst [vmem:[%s302] sm:$0xff] %v301
    %s304 = scalar_lea.vmem [#allocation3], 24
    %v305 = vld [vmem:[%s304] sm:$0xff]
    %306 = vmatprep.subr.mxu0 0.0
    %307 = vmatpush1.msra.mxu0 %v60
    %308 = vmatprep.subr.mxu0 0.0
    %309 = vmatpush1.msra.mxu0 %v61
    %310 = vmatprep.subr.mxu0 0.0
    %311 = vmatpush1.msra.mxu0 %v62
    %312 = vmatprep.subr.mxu0 0.0
    %313 = vmatpush1.msra.mxu0 %v63
    %314 = vmatprep.subr.mxu0 0.0
    %315 = vmatpush1.msra.mxu0 %v64
    %316 = vmatprep.subr.mxu0 0.0
    %317 = vmatpush1.msra.mxu0 %v65
    %318 = vmatprep.subr.mxu0 0.0
    %319 = vmatpush1.msra.mxu0 %v66
    %320 = vmatprep.subr.mxu0 0.0
    %321 = vmatpush1.msra.mxu0 %v67
    %322 = vmatprep.subr.mxu0 0.0
    %323 = vmatpush1.msra.mxu0 %v68
    %324 = vmatprep.subr.mxu0 0.0
    %325 = vmatpush1.msra.mxu0 %v69
    %326 = vmatprep.subr.mxu0 0.0
    %327 = vmatpush1.msra.mxu0 %v70
    %328 = vmatprep.subr.mxu0 0.0
    %329 = vmatpush1.msra.mxu0 %v71
    %330 = vmatprep.subr.mxu0 0.0
    %331 = vmatpush1.msra.mxu0 %v72
    %332 = vmatprep.subr.mxu0 0.0
    %333 = vmatpush1.msra.mxu0 %v73
    %334 = vmatprep.subr.mxu0 0.0
    %335 = vmatpush1.msra.mxu0 %v74
    %336 = vmatprep.subr.mxu0 0.0
    %337 = vmatpush1.msra.mxu0 %v75
    %338 = vmatprep.subr.mxu0 0.0
    %339 = vmatpush1.msra.mxu0 0.0
    %340 = vmatprep.subr.mxu0 0.0
    %341 = vmatpush1.msra.mxu0 0.0
    %342 = vmatprep.subr.mxu0 0.0
    %343 = vmatpush1.msra.mxu0 0.0
    %344 = vmatprep.subr.mxu0 0.0
    %345 = vmatpush1.msra.mxu0 0.0
    %346 = vmatprep.subr.mxu0 0.0
    %347 = vmatpush1.msra.mxu0 0.0
    %348 = vmatprep.subr.mxu0 0.0
    %349 = vmatpush1.msra.mxu0 0.0
    %350 = vmatprep.subr.mxu0 0.0
    %351 = vmatpush1.msra.mxu0 0.0
    %352 = vmatprep.subr.mxu0 0.0
    %353 = vmatpush1.msra.mxu0 0.0
    %354 = vmatprep.subr.mxu0 0.0
    %355 = vmatpush1.msra.mxu0 0.0
    %356 = vmatprep.subr.mxu0 0.0
    %357 = vmatpush1.msra.mxu0 0.0
    %358 = vmatprep.subr.mxu0 0.0
    %359 = vmatpush1.msra.mxu0 0.0
    %360 = vmatprep.subr.mxu0 0.0
    %361 = vmatpush1.msra.mxu0 0.0
    %362 = vmatprep.subr.mxu0 0.0
    %363 = vmatpush1.msra.mxu0 0.0
    %364 = vmatprep.subr.mxu0 0.0
    %365 = vmatpush1.msra.mxu0 0.0
    %366 = vmatprep.subr.mxu0 0.0
    %367 = vmatpush1.msra.mxu0 0.0
    %368 = vmatprep.subr.mxu0 0.0
    %369 = vmatpush1.msra.mxu0 0.0
    %370 = vmatprep.mubr.f32.mxu0 0.0
    %371 = vmatmul.mubr.f32.gmra.mrb[0].mxu0 %v301
    %v372 = vpop.f32.mrb[0].mxu0
    %v373 = vadd.f32 %v305, %v372
    %v374 = vpop.f32.mrb[0].mxu0
    %375 = vdwg.mxu0
    %v376 = vtanh.pop %v373
    %s377 = scalar_lea.vmem [#allocation9], 24
    %378 = vst [vmem:[%s377] sm:$0xff] %v376
    %s379 = scalar_lea.vmem [#allocation3], 32
    %v380 = vld [vmem:[%s379] sm:$0xff]
    %381 = vmatprep.subr.mxu0 0.0
    %382 = vmatpush1.msra.mxu0 %v60
    %383 = vmatprep.subr.mxu0 0.0
    %384 = vmatpush1.msra.mxu0 %v61
    %385 = vmatprep.subr.mxu0 0.0
    %386 = vmatpush1.msra.mxu0 %v62
    %387 = vmatprep.subr.mxu0 0.0
    %388 = vmatpush1.msra.mxu0 %v63
    %389 = vmatprep.subr.mxu0 0.0
    %390 = vmatpush1.msra.mxu0 %v64
    %391 = vmatprep.subr.mxu0 0.0
    %392 = vmatpush1.msra.mxu0 %v65
    %393 = vmatprep.subr.mxu0 0.0
    %394 = vmatpush1.msra.mxu0 %v66
    %395 = vmatprep.subr.mxu0 0.0
    %396 = vmatpush1.msra.mxu0 %v67
    %397 = vmatprep.subr.mxu0 0.0
    %398 = vmatpush1.msra.mxu0 %v68
    %399 = vmatprep.subr.mxu0 0.0
    %400 = vmatpush1.msra.mxu0 %v69
    %401 = vmatprep.subr.mxu0 0.0
    %402 = vmatpush1.msra.mxu0 %v70
    %403 = vmatprep.subr.mxu0 0.0
    %404 = vmatpush1.msra.mxu0 %v71
    %405 = vmatprep.subr.mxu0 0.0
    %406 = vmatpush1.msra.mxu0 %v72
    %407 = vmatprep.subr.mxu0 0.0
    %408 = vmatpush1.msra.mxu0 %v73
    %409 = vmatprep.subr.mxu0 0.0
    %410 = vmatpush1.msra.mxu0 %v74
    %411 = vmatprep.subr.mxu0 0.0
    %412 = vmatpush1.msra.mxu0 %v75
    %413 = vmatprep.subr.mxu0 0.0
    %414 = vmatpush1.msra.mxu0 0.0
    %415 = vmatprep.subr.mxu0 0.0
    %416 = vmatpush1.msra.mxu0 0.0
    %417 = vmatprep.subr.mxu0 0.0
    %418 = vmatpush1.msra.mxu0 0.0
    %419 = vmatprep.subr.mxu0 0.0
    %420 = vmatpush1.msra.mxu0 0.0
    %421 = vmatprep.subr.mxu0 0.0
    %422 = vmatpush1.msra.mxu0 0.0
    %423 = vmatprep.subr.mxu0 0.0
    %424 = vmatpush1.msra.mxu0 0.0
    %425 = vmatprep.subr.mxu0 0.0
    %426 = vmatpush1.msra.mxu0 0.0
    %427 = vmatprep.subr.mxu0 0.0
    %428 = vmatpush1.msra.mxu0 0.0
    %429 = vmatprep.subr.mxu0 0.0
    %430 = vmatpush1.msra.mxu0 0.0
    %431 = vmatprep.subr.mxu0 0.0
    %432 = vmatpush1.msra.mxu0 0.0
    %433 = vmatprep.subr.mxu0 0.0
    %434 = vmatpush1.msra.mxu0 0.0
    %435 = vmatprep.subr.mxu0 0.0
    %436 = vmatpush1.msra.mxu0 0.0
    %437 = vmatprep.subr.mxu0 0.0
    %438 = vmatpush1.msra.mxu0 0.0
    %439 = vmatprep.subr.mxu0 0.0
    %440 = vmatpush1.msra.mxu0 0.0
    %441 = vmatprep.subr.mxu0 0.0
    %442 = vmatpush1.msra.mxu0 0.0
    %443 = vmatprep.subr.mxu0 0.0
    %444 = vmatpush1.msra.mxu0 0.0
    %445 = vmatprep.mubr.f32.mxu0 0.0
    %446 = vmatmul.mubr.f32.gmra.mrb[0].mxu0 %v376
    %v447 = vpop.f32.mrb[0].mxu0
    %v448 = vadd.f32 %v380, %v447
    %v449 = vpop.f32.mrb[0].mxu0
    %450 = vdwg.mxu0
    %v451 = vtanh.pop %v448
    %s452 = scalar_lea.vmem [#allocation9], 32
    %453 = vst [vmem:[%s452] sm:$0xff] %v451
    %s454 = scalar_lea.vmem [#allocation3], 40
    %v455 = vld [vmem:[%s454] sm:$0xff]
    %456 = vmatprep.subr.mxu0 0.0
    %457 = vmatpush1.msra.mxu0 %v60
    %458 = vmatprep.subr.mxu0 0.0
    %459 = vmatpush1.msra.mxu0 %v61
    %460 = vmatprep.subr.mxu0 0.0
    %461 = vmatpush1.msra.mxu0 %v62
    %462 = vmatprep.subr.mxu0 0.0
    %463 = vmatpush1.msra.mxu0 %v63
    %464 = vmatprep.subr.mxu0 0.0
    %465 = vmatpush1.msra.mxu0 %v64
    %466 = vmatprep.subr.mxu0 0.0
    %467 = vmatpush1.msra.mxu0 %v65
    %468 = vmatprep.subr.mxu0 0.0
    %469 = vmatpush1.msra.mxu0 %v66
    %470 = vmatprep.subr.mxu0 0.0
    %471 = vmatpush1.msra.mxu0 %v67
    %472 = vmatprep.subr.mxu0 0.0
    %473 = vmatpush1.msra.mxu0 %v68
    %474 = vmatprep.subr.mxu0 0.0
    %475 = vmatpush1.msra.mxu0 %v69
    %476 = vmatprep.subr.mxu0 0.0
    %477 = vmatpush1.msra.mxu0 %v70
    %478 = vmatprep.subr.mxu0 0.0
    %479 = vmatpush1.msra.mxu0 %v71
    %480 = vmatprep.subr.mxu0 0.0
    %481 = vmatpush1.msra.mxu0 %v72
    %482 = vmatprep.subr.mxu0 0.0
    %483 = vmatpush1.msra.mxu0 %v73
    %484 = vmatprep.subr.mxu0 0.0
    %485 = vmatpush1.msra.mxu0 %v74
    %486 = vmatprep.subr.mxu0 0.0
    %487 = vmatpush1.msra.mxu0 %v75
    %488 = vmatprep.subr.mxu0 0.0
    %489 = vmatpush1.msra.mxu0 0.0
    %490 = vmatprep.subr.mxu0 0.0
    %491 = vmatpush1.msra.mxu0 0.0
    %492 = vmatprep.subr.mxu0 0.0
    %493 = vmatpush1.msra.mxu0 0.0
    %494 = vmatprep.subr.mxu0 0.0
    %495 = vmatpush1.msra.mxu0 0.0
    %496 = vmatprep.subr.mxu0 0.0
    %497 = vmatpush1.msra.mxu0 0.0
    %498 = vmatprep.subr.mxu0 0.0
    %499 = vmatpush1.msra.mxu0 0.0
    %500 = vmatprep.subr.mxu0 0.0
    %501 = vmatpush1.msra.mxu0 0.0
    %502 = vmatprep.subr.mxu0 0.0
    %503 = vmatpush1.msra.mxu0 0.0
    %504 = vmatprep.subr.mxu0 0.0
    %505 = vmatpush1.msra.mxu0 0.0
    %506 = vmatprep.subr.mxu0 0.0
    %507 = vmatpush1.msra.mxu0 0.0
    %508 = vmatprep.subr.mxu0 0.0
    %509 = vmatpush1.msra.mxu0 0.0
    %510 = vmatprep.subr.mxu0 0.0
    %511 = vmatpush1.msra.mxu0 0.0
    %512 = vmatprep.subr.mxu0 0.0
    %513 = vmatpush1.msra.mxu0 0.0
    %514 = vmatprep.subr.mxu0 0.0
    %515 = vmatpush1.msra.mxu0 0.0
    %516 = vmatprep.subr.mxu0 0.0
    %517 = vmatpush1.msra.mxu0 0.0
    %518 = vmatprep.subr.mxu0 0.0
    %519 = vmatpush1.msra.mxu0 0.0
    %520 = vmatprep.mubr.f32.mxu0 0.0
    %521 = vmatmul.mubr.f32.gmra.mrb[0].mxu0 %v451
    %v522 = vpop.f32.mrb[0].mxu0
    %v523 = vadd.f32 %v455, %v522
    %v524 = vpop.f32.mrb[0].mxu0
    %525 = vdwg.mxu0
    %v526 = vtanh.pop %v523
    %s527 = scalar_lea.vmem [#allocation9], 40
    %528 = vst [vmem:[%s527] sm:$0xff] %v526
    %s529 = scalar_lea.vmem [#allocation3], 48
    %v530 = vld [vmem:[%s529] sm:$0xff]
    %531 = vmatprep.subr.mxu0 0.0
    %532 = vmatpush1.msra.mxu0 %v60
    %533 = vmatprep.subr.mxu0 0.0
    %534 = vmatpush1.msra.mxu0 %v61
    %535 = vmatprep.subr.mxu0 0.0
    %536 = vmatpush1.msra.mxu0 %v62
    %537 = vmatprep.subr.mxu0 0.0
    %538 = vmatpush1.msra.mxu0 %v63
    %539 = vmatprep.subr.mxu0 0.0
    %540 = vmatpush1.msra.mxu0 %v64
    %541 = vmatprep.subr.mxu0 0.0
    %542 = vmatpush1.msra.mxu0 %v65
    %543 = vmatprep.subr.mxu0 0.0
    %544 = vmatpush1.msra.mxu0 %v66
    %545 = vmatprep.subr.mxu0 0.0
    %546 = vmatpush1.msra.mxu0 %v67
    %547 = vmatprep.subr.mxu0 0.0
    %548 = vmatpush1.msra.mxu0 %v68
    %549 = vmatprep.subr.mxu0 0.0
    %550 = vmatpush1.msra.mxu0 %v69
    %551 = vmatprep.subr.mxu0 0.0
    %552 = vmatpush1.msra.mxu0 %v70
    %553 = vmatprep.subr.mxu0 0.0
    %554 = vmatpush1.msra.mxu0 %v71
    %555 = vmatprep.subr.mxu0 0.0
    %556 = vmatpush1.msra.mxu0 %v72
    %557 = vmatprep.subr.mxu0 0.0
    %558 = vmatpush1.msra.mxu0 %v73
    %559 = vmatprep.subr.mxu0 0.0
    %560 = vmatpush1.msra.mxu0 %v74
    %561 = vmatprep.subr.mxu0 0.0
    %562 = vmatpush1.msra.mxu0 %v75
    %563 = vmatprep.subr.mxu0 0.0
    %564 = vmatpush1.msra.mxu0 0.0
    %565 = vmatprep.subr.mxu0 0.0
    %566 = vmatpush1.msra.mxu0 0.0
    %567 = vmatprep.subr.mxu0 0.0
    %568 = vmatpush1.msra.mxu0 0.0
    %569 = vmatprep.subr.mxu0 0.0
    %570 = vmatpush1.msra.mxu0 0.0
    %571 = vmatprep.subr.mxu0 0.0
    %572 = vmatpush1.msra.mxu0 0.0
    %573 = vmatprep.subr.mxu0 0.0
    %574 = vmatpush1.msra.mxu0 0.0
    %575 = vmatprep.subr.mxu0 0.0
    %576 = vmatpush1.msra.mxu0 0.0
    %577 = vmatprep.subr.mxu0 0.0
    %578 = vmatpush1.msra.mxu0 0.0
    %579 = vmatprep.subr.mxu0 0.0
    %580 = vmatpush1.msra.mxu0 0.0
    %581 = vmatprep.subr.mxu0 0.0
    %582 = vmatpush1.msra.mxu0 0.0
    %583 = vmatprep.subr.mxu0 0.0
    %584 = vmatpush1.msra.mxu0 0.0
    %585 = vmatprep.subr.mxu0 0.0
    %586 = vmatpush1.msra.mxu0 0.0
    %587 = vmatprep.subr.mxu0 0.0
    %588 = vmatpush1.msra.mxu0 0.0
    %589 = vmatprep.subr.mxu0 0.0
    %590 = vmatpush1.msra.mxu0 0.0
    %591 = vmatprep.subr.mxu0 0.0
    %592 = vmatpush1.msra.mxu0 0.0
    %593 = vmatprep.subr.mxu0 0.0
    %594 = vmatpush1.msra.mxu0 0.0
    %595 = vmatprep.mubr.f32.mxu0 0.0
    %596 = vmatmul.mubr.f32.gmra.mrb[0].mxu0 %v526
    %v597 = vpop.f32.mrb[0].mxu0
    %v598 = vadd.f32 %v530, %v597
    %v599 = vpop.f32.mrb[0].mxu0
    %600 = vdwg.mxu0
    %v601 = vtanh.pop %v598
    %s602 = scalar_lea.vmem [#allocation9], 48
    %603 = vst [vmem:[%s602] sm:$0xff] %v601
    %s604 = scalar_lea.vmem [#allocation3], 56
    %v605 = vld [vmem:[%s604] sm:$0xff]
    %606 = vmatprep.subr.mxu0 0.0
    %607 = vmatpush1.msra.mxu0 %v60
    %608 = vmatprep.subr.mxu0 0.0
    %609 = vmatpush1.msra.mxu0 %v61
    %610 = vmatprep.subr.mxu0 0.0
    %611 = vmatpush1.msra.mxu0 %v62
    %612 = vmatprep.subr.mxu0 0.0
    %613 = vmatpush1.msra.mxu0 %v63
    %614 = vmatprep.subr.mxu0 0.0
    %615 = vmatpush1.msra.mxu0 %v64
    %616 = vmatprep.subr.mxu0 0.0
    %617 = vmatpush1.msra.mxu0 %v65
    %618 = vmatprep.subr.mxu0 0.0
    %619 = vmatpush1.msra.mxu0 %v66
    %620 = vmatprep.subr.mxu0 0.0
    %621 = vmatpush1.msra.mxu0 %v67
    %622 = vmatprep.subr.mxu0 0.0
    %623 = vmatpush1.msra.mxu0 %v68
    %624 = vmatprep.subr.mxu0 0.0
    %625 = vmatpush1.msra.mxu0 %v69
    %626 = vmatprep.subr.mxu0 0.0
    %627 = vmatpush1.msra.mxu0 %v70
    %628 = vmatprep.subr.mxu0 0.0
    %629 = vmatpush1.msra.mxu0 %v71
    %630 = vmatprep.subr.mxu0 0.0
    %631 = vmatpush1.msra.mxu0 %v72
    %632 = vmatprep.subr.mxu0 0.0
    %633 = vmatpush1.msra.mxu0 %v73
    %634 = vmatprep.subr.mxu0 0.0
    %635 = vmatpush1.msra.mxu0 %v74
    %636 = vmatprep.subr.mxu0 0.0
    %637 = vmatpush1.msra.mxu0 %v75
    %638 = vmatprep.subr.mxu0 0.0
    %639 = vmatpush1.msra.mxu0 0.0
    %640 = vmatprep.subr.mxu0 0.0
    %641 = vmatpush1.msra.mxu0 0.0
    %642 = vmatprep.subr.mxu0 0.0
    %643 = vmatpush1.msra.mxu0 0.0
    %644 = vmatprep.subr.mxu0 0.0
    %645 = vmatpush1.msra.mxu0 0.0
    %646 = vmatprep.subr.mxu0 0.0
    %647 = vmatpush1.msra.mxu0 0.0
    %648 = vmatprep.subr.mxu0 0.0
    %649 = vmatpush1.msra.mxu0 0.0
    %650 = vmatprep.subr.mxu0 0.0
    %651 = vmatpush1.msra.mxu0 0.0
    %652 = vmatprep.subr.mxu0 0.0
    %653 = vmatpush1.msra.mxu0 0.0
    %654 = vmatprep.subr.mxu0 0.0
    %655 = vmatpush1.msra.mxu0 0.0
    %656 = vmatprep.subr.mxu0 0.0
    %657 = vmatpush1.msra.mxu0 0.0
    %658 = vmatprep.subr.mxu0 0.0
    %659 = vmatpush1.msra.mxu0 0.0
    %660 = vmatprep.subr.mxu0 0.0
    %661 = vmatpush1.msra.mxu0 0.0
    %662 = vmatprep.subr.mxu0 0.0
    %663 = vmatpush1.msra.mxu0 0.0
    %664 = vmatprep.subr.mxu0 0.0
    %665 = vmatpush1.msra.mxu0 0.0
    %666 = vmatprep.subr.mxu0 0.0
    %667 = vmatpush1.msra.mxu0 0.0
    %668 = vmatprep.subr.mxu0 0.0
    %669 = vmatpush1.msra.mxu0 0.0
    %670 = vmatprep.mubr.f32.mxu0 0.0
    %671 = vmatmul.mubr.f32.gmra.mrb[0].mxu0 %v601
    %v672 = vpop.f32.mrb[0].mxu0
    %v673 = vadd.f32 %v605, %v672
    %v674 = vpop.f32.mrb[0].mxu0
    %675 = vdwg.mxu0
    %v676 = vtanh.pop %v673
    %s677 = scalar_lea.vmem [#allocation9], 56
    %678 = vst [vmem:[%s677] sm:$0xff] %v676
    %s679 = scalar_lea.vmem [#allocation3], 64
    %v680 = vld [vmem:[%s679] sm:$0xff]
    %681 = vmatprep.subr.mxu0 0.0
    %682 = vmatpush1.msra.mxu0 %v60
    %683 = vmatprep.subr.mxu0 0.0
    %684 = vmatpush1.msra.mxu0 %v61
    %685 = vmatprep.subr.mxu0 0.0
    %686 = vmatpush1.msra.mxu0 %v62
    %687 = vmatprep.subr.mxu0 0.0
    %688 = vmatpush1.msra.mxu0 %v63
    %689 = vmatprep.subr.mxu0 0.0
    %690 = vmatpush1.msra.mxu0 %v64
    %691 = vmatprep.subr.mxu0 0.0
    %692 = vmatpush1.msra.mxu0 %v65
    %693 = vmatprep.subr.mxu0 0.0
    %694 = vmatpush1.msra.mxu0 %v66
    %695 = vmatprep.subr.mxu0 0.0
    %696 = vmatpush1.msra.mxu0 %v67
    %697 = vmatprep.subr.mxu0 0.0
    %698 = vmatpush1.msra.mxu0 %v68
    %699 = vmatprep.subr.mxu0 0.0
    %700 = vmatpush1.msra.mxu0 %v69
    %701 = vmatprep.subr.mxu0 0.0
    %702 = vmatpush1.msra.mxu0 %v70
    %703 = vmatprep.subr.mxu0 0.0
    %704 = vmatpush1.msra.mxu0 %v71
    %705 = vmatprep.subr.mxu0 0.0
    %706 = vmatpush1.msra.mxu0 %v72
    %707 = vmatprep.subr.mxu0 0.0
    %708 = vmatpush1.msra.mxu0 %v73
    %709 = vmatprep.subr.mxu0 0.0
    %710 = vmatpush1.msra.mxu0 %v74
    %711 = vmatprep.subr.mxu0 0.0
    %712 = vmatpush1.msra.mxu0 %v75
    %713 = vmatprep.subr.mxu0 0.0
    %714 = vmatpush1.msra.mxu0 0.0
    %715 = vmatprep.subr.mxu0 0.0
    %716 = vmatpush1.msra.mxu0 0.0
    %717 = vmatprep.subr.mxu0 0.0
    %718 = vmatpush1.msra.mxu0 0.0
    %719 = vmatprep.subr.mxu0 0.0
    %720 = vmatpush1.msra.mxu0 0.0
    %721 = vmatprep.subr.mxu0 0.0
    %722 = vmatpush1.msra.mxu0 0.0
    %723 = vmatprep.subr.mxu0 0.0
    %724 = vmatpush1.msra.mxu0 0.0
    %725 = vmatprep.subr.mxu0 0.0
    %726 = vmatpush1.msra.mxu0 0.0
    %727 = vmatprep.subr.mxu0 0.0
    %728 = vmatpush1.msra.mxu0 0.0
    %729 = vmatprep.subr.mxu0 0.0
    %730 = vmatpush1.msra.mxu0 0.0
    %731 = vmatprep.subr.mxu0 0.0
    %732 = vmatpush1.msra.mxu0 0.0
    %733 = vmatprep.subr.mxu0 0.0
    %734 = vmatpush1.msra.mxu0 0.0
    %735 = vmatprep.subr.mxu0 0.0
    %736 = vmatpush1.msra.mxu0 0.0
    %737 = vmatprep.subr.mxu0 0.0
    %738 = vmatpush1.msra.mxu0 0.0
    %739 = vmatprep.subr.mxu0 0.0
    %740 = vmatpush1.msra.mxu0 0.0
    %741 = vmatprep.subr.mxu0 0.0
    %742 = vmatpush1.msra.mxu0 0.0
    %743 = vmatprep.subr.mxu0 0.0
    %744 = vmatpush1.msra.mxu0 0.0
    %745 = vmatprep.mubr.f32.mxu0 0.0
    %746 = vmatmul.mubr.f32.gmra.mrb[0].mxu0 %v676
    %v747 = vpop.f32.mrb[0].mxu0
    %v748 = vadd.f32 %v680, %v747
    %v749 = vpop.f32.mrb[0].mxu0
    %750 = vdwg.mxu0
    %v751 = vtanh.pop %v748
    %s752 = scalar_lea.vmem [#allocation9], 64
    %753 = vst [vmem:[%s752] sm:$0xff] %v751
    %754 = vst [vmem:[#allocation2] sm:$0xff] %v751
    // Predicated region
    $region30: #{tpu_custom_call.1} parent=1 // pred_check
      _
    $region31: #{tpu_custom_call.1} parent=1 // pred_check_branch
      %756 = sbr.rel (0) target = $region33
    $region32: #{tpu_custom_call.1} parent=1 // pred_region
      %s758 = ssub.s32 1152, 1152
      %759 = vsyncadd [#allocation5], %s758
      %s760 = sshll.u32 [#allocation9], 4
      %s761 = int_to_ptr.vmem [resolvable:$true] %s760
      %766 = dma.vmem_to_hbm [thread:$0]  %s761, 1152, %s3, [#allocation5], 128, 128, 8
    $region33: #{tpu_custom_call.1} parent=1 // pred_fallthru
      _
    // Predicated region
    $region34: #{tpu_custom_call.1} parent=1 // pred_check
      _
    $region35: #{tpu_custom_call.1} parent=1 // pred_check_branch
      %768 = sbr.rel (0) target = $region37
    $region36: #{tpu_custom_call.1} parent=1 // pred_region
      %769 = dma.done [#allocation5], 1152
    $region37: #{tpu_custom_call.1} parent=1 // pred_fallthru
      _
    %770 = vsyncpa [#allocation4], 1
    %771 = vsyncpa [#allocation7], 1
    %772 = vsyncpa [#allocation5], 1

</llo_original>
